<compile_context>
chip_gen: v7x
topology: tpu7x:2x2x1
jax: 0.10.0
libtpu: 0.0.40
codegen_flags: <defaults>
</compile_context>

<pallas_src>
import math

import jax
import jax.numpy as jnp
from jax import lax
from jax.experimental import pallas as pl
from jax.experimental.pallas import tpu as pltpu

SIGMA_ZERO = 0.5  # `sigma_zero` is an undefined global in the reference module; NoisyNet default.


def _round_up(v, m):
    return ((v + m - 1) // m) * m


def _noisy_linear_kernel(x_ref, wmu_ref, wsig_ref, eout_ref, ein_ref, bias_ref,
                         o_ref, acc_ref):
    """One (i, j, k) grid step of y = x @ (Wmu + Wsig*(eps_out⊗eps_in)).T + b."""
    k = pl.program_id(2)

    @pl.when(k == 0)
    def _():
        acc_ref[...] = jnp.zeros_like(acc_ref)

    # Effective weight tile (tn, tk), built on the VPU from the factorized noise.
    # eps_out tile is (tn, 1), eps_in tile is (1, tk): broadcast-mul == outer product.
    w = wmu_ref[...] + wsig_ref[...] * (eout_ref[...] * ein_ref[...])

    # y_tile += x_tile @ W_tile^T on the MXU, contracting In⊗In directly
    # (no in-kernel transpose / XLU relayout).
    acc_ref[...] += lax.dot_general(
        x_ref[...], w,
        dimension_numbers=(((1,), (1,)), ((), ())),
        preferred_element_type=jnp.float32)

    @pl.when(k == pl.num_programs(2) - 1)
    def _():
        o_ref[...] = (acc_ref[...] + bias_ref[...]).astype(o_ref.dtype)


def noisy_linear(x, weight_mu, weight_sigma, bias_mu, bias_sigma,
                 eps_in, eps_out):
    """NoisyLinear forward.

    x:            (B, In)
    weight_mu/σ:  (Out, In)   -- torch F.linear layout
    bias_mu/σ:    (Out,)
    eps_in:       (In,)       -- factorized noise (eps_out ⊗ eps_in = weight_epsilon)
    eps_out:      (Out,)
    returns:      (B, Out)
    """
    B, In = x.shape
    Out = weight_mu.shape[0]
    dtype = x.dtype

    # ---- Effective bias computed once, outside the kernel (O(Out)). ----------
    bias_eff = (bias_mu + bias_sigma * eps_out).astype(jnp.float32)

    # ---- Tile selection: lane-dense, (8,128)-aligned, VMEM-safe on all gens. --
    tm = min(_round_up(B, 8), 256)
    tn = min(_round_up(Out, 128), 256)
    tk = min(_round_up(In, 128), 512)
    Mp = _round_up(B, tm)
    Np = _round_up(Out, tn)
    Kp = _round_up(In, tk)

    # ---- Zero-pad operands to the tiled shapes (padding contributes zeros). ---
    xp = jnp.zeros((Mp, Kp), dtype).at[:B, :In].set(x)
    wmu_p = jnp.zeros((Np, Kp), weight_mu.dtype).at[:Out, :In].set(weight_mu)
    wsig_p = jnp.zeros((Np, Kp), weight_sigma.dtype).at[:Out, :In].set(weight_sigma)
    eout_p = jnp.zeros((Np, 1), weight_mu.dtype).at[:Out, 0].set(eps_out)
    ein_p = jnp.zeros((1, Kp), weight_mu.dtype).at[0, :In].set(eps_in)
    bias_p = jnp.zeros((1, Np), jnp.float32).at[0, :Out].set(bias_eff)

    grid = (Mp // tm, Np // tn, Kp // tk)

    out_padded = pl.pallas_call(
        _noisy_linear_kernel,
        out_shape=jax.ShapeDtypeStruct((Mp, Np), dtype),
        grid_spec=pltpu.PrefetchScalarGridSpec(
            num_scalar_prefetch=0,
            grid=grid,
            in_specs=[
                pl.BlockSpec((tm, tk), lambda i, j, k: (i, k)),   # x
                pl.BlockSpec((tn, tk), lambda i, j, k: (j, k)),   # weight_mu
                pl.BlockSpec((tn, tk), lambda i, j, k: (j, k)),   # weight_sigma
                pl.BlockSpec((tn, 1), lambda i, j, k: (j, 0)),    # eps_out column
                pl.BlockSpec((1, tk), lambda i, j, k: (0, k)),    # eps_in row
                pl.BlockSpec((1, tn), lambda i, j, k: (0, j)),    # effective bias
            ],
            out_specs=pl.BlockSpec((tm, tn), lambda i, j, k: (i, j)),
            scratch_shapes=[pltpu.VMEM((tm, tn), jnp.float32)],
        ),
        compiler_params=pltpu.CompilerParams(
            dimension_semantics=("parallel", "parallel", "arbitrary")),
    )(xp, wmu_p, wsig_p, eout_p, ein_p, bias_p)

    return out_padded[:B, :Out]


# --------------------------- init (matches the torch module) ------------------

def _scale_noise(key, size):
    # torch: x = randn(size); x.sign() * sqrt(|x|)
    x = jax.random.normal(key, (size,), dtype=jnp.float32)
    return jnp.sign(x) * jnp.sqrt(jnp.abs(x))


def init_noisy_linear_params(key, in_features, out_features):
    """Deterministic re-implementation of reset_parameters() + reset_noise().

    Returns factorized noise (eps_in, eps_out); weight_epsilon = outer(eps_out, eps_in).
    """
    k_wmu, k_bmu, k_ein, k_eout = jax.random.split(key, 4)
    mu_range = 1.0 / math.sqrt(in_features)

    weight_mu = jax.random.uniform(
        k_wmu, (out_features, in_features), jnp.float32, -mu_range, mu_range)
    weight_sigma = jnp.full((out_features, in_features),
                            SIGMA_ZERO / math.sqrt(in_features), jnp.float32)
    bias_mu = jax.random.uniform(
        k_bmu, (out_features,), jnp.float32, -mu_range, mu_range)
    # Matches the reference module (sigma_zero / sqrt(out_features) for the bias).
    bias_sigma = jnp.full((out_features,),
                          SIGMA_ZERO / math.sqrt(out_features), jnp.float32)

    eps_in = _scale_noise(k_ein, in_features)
    eps_out = _scale_noise(k_eout, out_features)

    return weight_mu, weight_sigma, bias_mu, bias_sigma, eps_in, eps_out


if __name__ == "__main__":
    in_features = 32
    out_features = 16
    batch = 8

    key = jax.random.PRNGKey(0)
    k_params, k_x = jax.random.split(key)

    (weight_mu, weight_sigma, bias_mu, bias_sigma,
     eps_in, eps_out) = init_noisy_linear_params(k_params, in_features, out_features)
    x = jax.random.normal(k_x, (batch, in_features), dtype=jnp.float32)

    out = noisy_linear(x, weight_mu, weight_sigma, bias_mu, bias_sigma,
                       eps_in, eps_out)
    out = jax.block_until_ready(out)

    # Pure-JAX reference (same math as torch F.linear with materialized epsilon).
    weight_epsilon = jnp.outer(eps_out, eps_in)   # ger(eps_out, eps_in)
    bias_epsilon = eps_out
    ref = x @ (weight_mu + weight_sigma * weight_epsilon).T + (bias_mu + bias_sigma * bias_epsilon)

    assert out.shape == (batch, out_features)
    assert jnp.allclose(out, ref, atol=1e-5, rtol=1e-5)

    print("KERNEL_OK")
</pallas_src>

<mosaic_0001>
module attributes {stable_mosaic.version = 11 : i64} {
  func.func @_noisy_linear_kernel(%arg0: i32, %arg1: i32, %arg2: i32, %arg3: memref<8x128xf32, #tpu.memory_space<vmem>>, %arg4: memref<128x128xf32, #tpu.memory_space<vmem>>, %arg5: memref<128x128xf32, #tpu.memory_space<vmem>>, %arg6: memref<128x1xf32, #tpu.memory_space<vmem>>, %arg7: memref<1x128xf32, #tpu.memory_space<vmem>>, %arg8: memref<1x128xf32, #tpu.memory_space<vmem>>, %arg9: memref<8x128xf32, #tpu.memory_space<vmem>>, %arg10: memref<8x128xf32, #tpu.memory_space<vmem>>) attributes {dimension_semantics = [#tpu.dimension_semantics<parallel>, #tpu.dimension_semantics<parallel>, #tpu.dimension_semantics<arbitrary>], iteration_bounds = array<i64: 1, 1, 1>, scalar_prefetch = 0 : i64, scratch_operands = 1 : i64, tpu.core_type = #tpu.core_type<tc>, window_params = [{transform_indices = @transform_0, window_bounds = array<i64: 8, 128>}, {transform_indices = @transform_1, window_bounds = array<i64: 128, 128>}, {transform_indices = @transform_2, window_bounds = array<i64: 128, 128>}, {transform_indices = @transform_3, window_bounds = array<i64: 128, 1>}, {transform_indices = @transform_4, window_bounds = array<i64: 1, 128>}, {transform_indices = @transform_5, window_bounds = array<i64: 1, 128>}, {transform_indices = @transform_6, window_bounds = array<i64: 8, 128>}]} {
    %c0_i32 = arith.constant 0 : i32
    %0 = arith.cmpi eq, %arg2, %c0_i32 : i32
    %1 = arith.extui %0 : i1 to i32
    %c0_i32_0 = arith.constant 0 : i32
    %2 = arith.cmpi ne, %1, %c0_i32_0 : i32
    scf.if %2 {
      %cst_16 = arith.constant 0.000000e+00 : f32
      %20 = vector.broadcast %cst_16 : f32 to vector<8x128xf32>
      %c0_17 = arith.constant 0 : index
      %c0_18 = arith.constant 0 : index
      %21 = vector.load %arg10[%c0_17, %c0_18] : memref<8x128xf32, #tpu.memory_space<vmem>>, vector<8x128xf32>
      tpu.vector_store %arg10[%c0_17, %c0_18], %20 {strides = array<i32>} : memref<8x128xf32, #tpu.memory_space<vmem>>, vector<8x128xf32>,
    } else {
    }
    %c0 = arith.constant 0 : index
    %c0_1 = arith.constant 0 : index
    %3 = vector.load %arg4[%c0, %c0_1] : memref<128x128xf32, #tpu.memory_space<vmem>>, vector<128x128xf32>
    %c0_2 = arith.constant 0 : index
    %c0_3 = arith.constant 0 : index
    %4 = vector.load %arg5[%c0_2, %c0_3] : memref<128x128xf32, #tpu.memory_space<vmem>>, vector<128x128xf32>
    %c0_4 = arith.constant 0 : index
    %c0_5 = arith.constant 0 : index
    %5 = vector.load %arg6[%c0_4, %c0_5] : memref<128x1xf32, #tpu.memory_space<vmem>>, vector<128x1xf32>
    %c0_6 = arith.constant 0 : index
    %c0_7 = arith.constant 0 : index
    %6 = vector.load %arg7[%c0_6, %c0_7] : memref<1x128xf32, #tpu.memory_space<vmem>>, vector<1x128xf32>
    %7 = vector.broadcast %5 : vector<128x1xf32> to vector<128x128xf32>
    %8 = vector.broadcast %6 : vector<1x128xf32> to vector<128x128xf32>
    %9 = arith.mulf %7, %8 : vector<128x128xf32>
    %10 = arith.mulf %4, %9 : vector<128x128xf32>
    %11 = arith.addf %3, %10 : vector<128x128xf32>
    %c0_8 = arith.constant 0 : index
    %c0_9 = arith.constant 0 : index
    %12 = vector.load %arg10[%c0_8, %c0_9] : memref<8x128xf32, #tpu.memory_space<vmem>>, vector<8x128xf32>
    %c0_10 = arith.constant 0 : index
    %c0_11 = arith.constant 0 : index
    %13 = vector.load %arg3[%c0_10, %c0_11] : memref<8x128xf32, #tpu.memory_space<vmem>>, vector<8x128xf32>
    %cst = arith.constant dense<0.000000e+00> : vector<8x128xf32>
    %14 = tpu.matmul %13, %11, %cst {dimension_numbers = #tpu.dot_dimension_numbers<[1], [1], [0], [0], [0, 0, 1, 0], [], []>} : vector<8x128xf32>, vector<128x128xf32>, vector<8x128xf32> -> vector<8x128xf32>
    %15 = arith.addf %12, %14 : vector<8x128xf32>
    %c0_12 = arith.constant 0 : index
    %c0_13 = arith.constant 0 : index
    %16 = vector.load %arg10[%c0_12, %c0_13] : memref<8x128xf32, #tpu.memory_space<vmem>>, vector<8x128xf32>
    tpu.vector_store %arg10[%c0_12, %c0_13], %15 {strides = array<i32>} : memref<8x128xf32, #tpu.memory_space<vmem>>, vector<8x128xf32>,
    %c0_i32_14 = arith.constant 0 : i32
    %17 = arith.cmpi eq, %arg2, %c0_i32_14 : i32
    %18 = arith.extui %17 : i1 to i32
    %c0_i32_15 = arith.constant 0 : i32
    %19 = arith.cmpi ne, %18, %c0_i32_15 : i32
    scf.if %19 {
      %c0_16 = arith.constant 0 : index
      %c0_17 = arith.constant 0 : index
      %20 = vector.load %arg10[%c0_16, %c0_17] : memref<8x128xf32, #tpu.memory_space<vmem>>, vector<8x128xf32>
      %c0_18 = arith.constant 0 : index
      %c0_19 = arith.constant 0 : index
      %21 = vector.load %arg8[%c0_18, %c0_19] : memref<1x128xf32, #tpu.memory_space<vmem>>, vector<1x128xf32>
      %22 = vector.broadcast %21 : vector<1x128xf32> to vector<8x128xf32>
      %23 = arith.addf %20, %22 : vector<8x128xf32>
      %c0_20 = arith.constant 0 : index
      %c0_21 = arith.constant 0 : index
      %24 = vector.load %arg9[%c0_20, %c0_21] : memref<8x128xf32, #tpu.memory_space<vmem>>, vector<8x128xf32>
      tpu.vector_store %arg9[%c0_20, %c0_21], %23 {strides = array<i32>} : memref<8x128xf32, #tpu.memory_space<vmem>>, vector<8x128xf32>,
    } else {
    }
    return
  }
  func.func @transform_0(%arg0: i32, %arg1: i32, %arg2: i32) -> (i32, i32) {
    %c0_i32 = arith.constant 0 : i32
    return %arg0, %arg2 : i32, i32
  }
  func.func @transform_1(%arg0: i32, %arg1: i32, %arg2: i32) -> (i32, i32) {
    %c0_i32 = arith.constant 0 : i32
    return %arg1, %arg2 : i32, i32
  }
  func.func @transform_2(%arg0: i32, %arg1: i32, %arg2: i32) -> (i32, i32) {
    %c0_i32 = arith.constant 0 : i32
    return %arg1, %arg2 : i32, i32
  }
  func.func @transform_3(%arg0: i32, %arg1: i32, %arg2: i32) -> (i32, i32) {
    %c0_i32 = arith.constant 0 : i32
    %c0_i32_0 = arith.constant 0 : i32
    return %arg1, %c0_i32 : i32, i32
  }
  func.func @transform_4(%arg0: i32, %arg1: i32, %arg2: i32) -> (i32, i32) {
    %c0_i32 = arith.constant 0 : i32
    %c0_i32_0 = arith.constant 0 : i32
    return %c0_i32, %arg2 : i32, i32
  }
  func.func @transform_5(%arg0: i32, %arg1: i32, %arg2: i32) -> (i32, i32) {
    %c0_i32 = arith.constant 0 : i32
    %c0_i32_0 = arith.constant 0 : i32
    return %c0_i32, %arg1 : i32, i32
  }
  func.func @transform_6(%arg0: i32, %arg1: i32, %arg2: i32) -> (i32, i32) {
    %c0_i32 = arith.constant 0 : i32
    return %arg0, %arg1 : i32, i32
  }
}

</mosaic_0001>

<llo_original>
// kernel: tpu_custom_call.1
$region0: #{tpu_custom_call.1}
  #allocation0 [shape = 'u32[]', space=smem, size = 0x4, offset = 0x4, fixed_abs, tag = 'smem constant byte address 0x4 - core index']
  #allocation1 [shape = 'u32[144,128]{1,0:T(1,128)}', space=vmem, size = 0x12000, scoped, tag = 'internal scratch']
  #allocation2 [shape = 'f32[8,128]{1,0:T(8,128)}', space=vmem, size = 0x1000, scoped, tag = 'scratch operand']
  %s0 = inlined_call_operand.hbm [shape: f32[8,128], index: 0, kind: input, shape index: {}]
  %s1 = inlined_call_operand.vmem [shape: f32[128,128], index: 1, kind: input, shape index: {}]
  %s2 = inlined_call_operand.hbm [shape: f32[128,128], index: 2, kind: input, shape index: {}]
  %s3 = inlined_call_operand.vmem [shape: f32[128,1], index: 3, kind: input, shape index: {}]
  %s4 = inlined_call_operand.vmem [shape: f32[1,128], index: 4, kind: input, shape index: {}]
  %s5 = inlined_call_operand.vmem [shape: f32[1,128], index: 5, kind: input, shape index: {}]
  %s6 = inlined_call_operand.hbm [shape: f32[8,128], index: 6, kind: output, shape index: {}]
  %s7 = sld [smem:[#allocation0]]
  $region50: #{tpu_custom_call.1} parent=0
    _
  %s9 = ssub.s32 1, %s7
  %s10 = scalar_select 0, %s9, %s7
  $region1: #{tpu_custom_call.1} parent=0
    #allocation3 [shape = 'u8[4096]{0}', space=vmem, size = 0x1000, scoped, tag = 'input window, operand 0, single buffered']
    #allocation4 [shape = 's32[1]{0}', space=sflag, size = 0x4, scoped, tag = 'scoped memory for tpu_custom_call.1']
    #allocation5 [shape = 's32[1]{0}', space=sflag, size = 0x4, scoped, tag = 'scoped memory for tpu_custom_call.1']
    #allocation6 [shape = 'u8[65536]{0}', space=vmem, size = 0x10000, scoped, tag = 'input window, operand 2, single buffered']
    #allocation7 [shape = 's32[1]{0}', space=sflag, size = 0x4, scoped, tag = 'scoped memory for tpu_custom_call.1']
    #allocation8 [shape = 'u8[4096]{0}', space=vmem, size = 0x1000, scoped, tag = 'output window, operand 0, single buffered']
    %11 = vsyncpa [#allocation4], 0
    %12 = vsyncpa [#allocation7], 0
    %13 = vsyncpa [#allocation5], 0
    // Predicated region
    $region2: #{tpu_custom_call.1} parent=1 // pred_check
      _
    $region3: #{tpu_custom_call.1} parent=1 // pred_check_branch
      %15 = sbr.rel (0) target = $region5
    $region4: #{tpu_custom_call.1} parent=1 // pred_region
      %s17 = ssub.s32 128, 128
      %18 = vsyncadd [#allocation4], %s17
      %s20 = sshll.u32 [#allocation3], 4
      %s21 = int_to_ptr.vmem [resolvable:$true] %s20
      %23 = dma.hbm_to_vmem [thread:$0]  %s0, 128, %s21, [#allocation4]
    $region5: #{tpu_custom_call.1} parent=1 // pred_fallthru
      _
    // Predicated region
    $region6: #{tpu_custom_call.1} parent=1 // pred_check
      _
    $region7: #{tpu_custom_call.1} parent=1 // pred_check_branch
      %25 = sbr.rel (0) target = $region9
    $region8: #{tpu_custom_call.1} parent=1 // pred_region
      _
    $region9: #{tpu_custom_call.1} parent=1 // pred_fallthru
      _
    // Predicated region
    $region10: #{tpu_custom_call.1} parent=1 // pred_check
      _
    $region11: #{tpu_custom_call.1} parent=1 // pred_check_branch
      %27 = sbr.rel (0) target = $region13
    $region12: #{tpu_custom_call.1} parent=1 // pred_region
      %s29 = ssub.s32 2048, 2048
      %30 = vsyncadd [#allocation7], %s29
      %s31 = sshll.u32 [#allocation6], 4
      %s32 = int_to_ptr.vmem [resolvable:$true] %s31
      %37 = dma.hbm_to_vmem [thread:$0]  %s2, 2048, %s32, [#allocation7], 128, 128, 8
    $region13: #{tpu_custom_call.1} parent=1 // pred_fallthru
      _
    // Predicated region
    $region14: #{tpu_custom_call.1} parent=1 // pred_check
      _
    $region15: #{tpu_custom_call.1} parent=1 // pred_check_branch
      %39 = sbr.rel (0) target = $region17
    $region16: #{tpu_custom_call.1} parent=1 // pred_region
      _
    $region17: #{tpu_custom_call.1} parent=1 // pred_fallthru
      _
    // Predicated region
    $region18: #{tpu_custom_call.1} parent=1 // pred_check
      _
    $region19: #{tpu_custom_call.1} parent=1 // pred_check_branch
      %41 = sbr.rel (0) target = $region21
    $region20: #{tpu_custom_call.1} parent=1 // pred_region
      _
    $region21: #{tpu_custom_call.1} parent=1 // pred_fallthru
      _
    // Predicated region
    $region22: #{tpu_custom_call.1} parent=1 // pred_check
      _
    $region23: #{tpu_custom_call.1} parent=1 // pred_check_branch
      %43 = sbr.rel (0) target = $region25
    $region24: #{tpu_custom_call.1} parent=1 // pred_region
      _
    $region25: #{tpu_custom_call.1} parent=1 // pred_fallthru
      _
    // Predicated region
    $region26: #{tpu_custom_call.1} parent=1 // pred_check
      _
    $region27: #{tpu_custom_call.1} parent=1 // pred_check_branch
      %45 = sbr.rel (0) target = $region29
    $region28: #{tpu_custom_call.1} parent=1 // pred_region
      %46 = dma.done [#allocation4], 128
    $region29: #{tpu_custom_call.1} parent=1 // pred_fallthru
      _
    // Predicated region
    $region30: #{tpu_custom_call.1} parent=1 // pred_check
      _
    $region31: #{tpu_custom_call.1} parent=1 // pred_check_branch
      %48 = sbr.rel (0) target = $region33
    $region32: #{tpu_custom_call.1} parent=1 // pred_region
      %49 = dma.done [#allocation7], 2048
    $region33: #{tpu_custom_call.1} parent=1 // pred_fallthru
      _
    %p50 = scmp.eq.s32.totalorder 0, 0
    // Predicated region
    $region34: #{tpu_custom_call.1} parent=1 // pred_check
      %p51 = pneg %p50
    $region35: #{tpu_custom_call.1} parent=1 // pred_check_branch
      %53 = sbr.rel (%p51) target = $region37
    $region36: #{tpu_custom_call.1} parent=1 // pred_region
      %54 = vst [vmem:[#allocation2] sm:$0xff] 0.0
    $region37: #{tpu_custom_call.1} parent=1 // pred_fallthru
      _
    %v55 = vld [vmem:[%s1] sm:$0xff]
    %v56 = vld [vmem:[%s1 + $0x8] sm:$0xff]
    %v57 = vld [vmem:[%s1 + $0x10] sm:$0xff]
    %v58 = vld [vmem:[%s1 + $0x18] sm:$0xff]
    %v59 = vld [vmem:[%s1 + $0x20] sm:$0xff]
    %v60 = vld [vmem:[%s1 + $0x28] sm:$0xff]
    %v61 = vld [vmem:[%s1 + $0x30] sm:$0xff]
    %v62 = vld [vmem:[%s1 + $0x38] sm:$0xff]
    %v63 = vld [vmem:[%s1 + $0x40] sm:$0xff]
    %v64 = vld [vmem:[%s1 + $0x48] sm:$0xff]
    %v65 = vld [vmem:[%s1 + $0x50] sm:$0xff]
    %v66 = vld [vmem:[%s1 + $0x58] sm:$0xff]
    %v67 = vld [vmem:[%s1 + $0x60] sm:$0xff]
    %v68 = vld [vmem:[%s1 + $0x68] sm:$0xff]
    %v69 = vld [vmem:[%s1 + $0x70] sm:$0xff]
    %v70 = vld [vmem:[%s1 + $0x78] sm:$0xff]
    %v71 = vld [vmem:[#allocation6] sm:$0xff]
    %v72 = vld [vmem:[#allocation6 + $0x8] sm:$0xff]
    %v73 = vld [vmem:[#allocation6 + $0x10] sm:$0xff]
    %v74 = vld [vmem:[#allocation6 + $0x18] sm:$0xff]
    %v75 = vld [vmem:[#allocation6 + $0x20] sm:$0xff]
    %v76 = vld [vmem:[#allocation6 + $0x28] sm:$0xff]
    %v77 = vld [vmem:[#allocation6 + $0x30] sm:$0xff]
    %v78 = vld [vmem:[#allocation6 + $0x38] sm:$0xff]
    %v79 = vld [vmem:[#allocation6 + $0x40] sm:$0xff]
    %v80 = vld [vmem:[#allocation6 + $0x48] sm:$0xff]
    %v81 = vld [vmem:[#allocation6 + $0x50] sm:$0xff]
    %v82 = vld [vmem:[#allocation6 + $0x58] sm:$0xff]
    %v83 = vld [vmem:[#allocation6 + $0x60] sm:$0xff]
    %v84 = vld [vmem:[#allocation6 + $0x68] sm:$0xff]
    %v85 = vld [vmem:[#allocation6 + $0x70] sm:$0xff]
    %v86 = vld [vmem:[#allocation6 + $0x78] sm:$0xff]
    %v87 = vld [vmem:[%s3] sm:$0xff]
    %v88 = vld [vmem:[%s3 + $0x8] sm:$0xff]
    %v89 = vld [vmem:[%s3 + $0x10] sm:$0xff]
    %v90 = vld [vmem:[%s3 + $0x18] sm:$0xff]
    %v91 = vld [vmem:[%s3 + $0x20] sm:$0xff]
    %v92 = vld [vmem:[%s3 + $0x28] sm:$0xff]
    %v93 = vld [vmem:[%s3 + $0x30] sm:$0xff]
    %v94 = vld [vmem:[%s3 + $0x38] sm:$0xff]
    %v95 = vld [vmem:[%s3 + $0x40] sm:$0xff]
    %v96 = vld [vmem:[%s3 + $0x48] sm:$0xff]
    %v97 = vld [vmem:[%s3 + $0x50] sm:$0xff]
    %v98 = vld [vmem:[%s3 + $0x58] sm:$0xff]
    %v99 = vld [vmem:[%s3 + $0x60] sm:$0xff]
    %v100 = vld [vmem:[%s3 + $0x68] sm:$0xff]
    %v101 = vld [vmem:[%s3 + $0x70] sm:$0xff]
    %v102 = vld [vmem:[%s3 + $0x78] sm:$0xff]
    %v103 = vld [vmem:[%s4] sm:$0x1]
    %105 = vset.pattern.permute.xlu0 0
    %106 = vperm.xlu0 %105, %v87
    %v107 = vpop.permute.xlu0 %106
    %110 = vset.pattern.permute.xlu0 0
    %111 = vperm.xlu0 %110, %v88
    %v112 = vpop.permute.xlu0 %111
    %115 = vset.pattern.permute.xlu0 0
    %116 = vperm.xlu0 %115, %v89
    %v117 = vpop.permute.xlu0 %116
    %120 = vset.pattern.permute.xlu0 0
    %121 = vperm.xlu0 %120, %v90
    %v122 = vpop.permute.xlu0 %121
    %125 = vset.pattern.permute.xlu0 0
    %126 = vperm.xlu0 %125, %v91
    %v127 = vpop.permute.xlu0 %126
    %130 = vset.pattern.permute.xlu0 0
    %131 = vperm.xlu0 %130, %v92
    %v132 = vpop.permute.xlu0 %131
    %135 = vset.pattern.permute.xlu0 0
    %136 = vperm.xlu0 %135, %v93
    %v137 = vpop.permute.xlu0 %136
    %140 = vset.pattern.permute.xlu0 0
    %141 = vperm.xlu0 %140, %v94
    %v142 = vpop.permute.xlu0 %141
    %145 = vset.pattern.permute.xlu0 0
    %146 = vperm.xlu0 %145, %v95
    %v147 = vpop.permute.xlu0 %146
    %150 = vset.pattern.permute.xlu0 0
    %151 = vperm.xlu0 %150, %v96
    %v152 = vpop.permute.xlu0 %151
    %155 = vset.pattern.permute.xlu0 0
    %156 = vperm.xlu0 %155, %v97
    %v157 = vpop.permute.xlu0 %156
    %160 = vset.pattern.permute.xlu0 0
    %161 = vperm.xlu0 %160, %v98
    %v162 = vpop.permute.xlu0 %161
    %165 = vset.pattern.permute.xlu0 0
    %166 = vperm.xlu0 %165, %v99
    %v167 = vpop.permute.xlu0 %166
    %170 = vset.pattern.permute.xlu0 0
    %171 = vperm.xlu0 %170, %v100
    %v172 = vpop.permute.xlu0 %171
    %175 = vset.pattern.permute.xlu0 0
    %176 = vperm.xlu0 %175, %v101
    %v177 = vpop.permute.xlu0 %176
    %180 = vset.pattern.permute.xlu0 0
    %181 = vperm.xlu0 %180, %v102
    %v182 = vpop.permute.xlu0 %181
    %v185 = vlaneseq
    %v186 = vshrl.u32 %v185, 7
    %v187 = vsub.s32 0, %v186
    %v188 = vrot.slane %v103, %v187
    %v190 = vmul.f32 %v107, %v188
    %v191 = vmul.f32 %v112, %v188
    %v192 = vmul.f32 %v117, %v188
    %v193 = vmul.f32 %v122, %v188
    %v194 = vmul.f32 %v127, %v188
    %v195 = vmul.f32 %v132, %v188
    %v196 = vmul.f32 %v137, %v188
    %v197 = vmul.f32 %v142, %v188
    %v198 = vmul.f32 %v147, %v188
    %v199 = vmul.f32 %v152, %v188
    %v200 = vmul.f32 %v157, %v188
    %v201 = vmul.f32 %v162, %v188
    %v202 = vmul.f32 %v167, %v188
    %v203 = vmul.f32 %v172, %v188
    %v204 = vmul.f32 %v177, %v188
    %v205 = vmul.f32 %v182, %v188
    %v206 = vmul.f32 %v71, %v190
    %v207 = vmul.f32 %v72, %v191
    %v208 = vmul.f32 %v73, %v192
    %v209 = vmul.f32 %v74, %v193
    %v210 = vmul.f32 %v75, %v194
    %v211 = vmul.f32 %v76, %v195
    %v212 = vmul.f32 %v77, %v196
    %v213 = vmul.f32 %v78, %v197
    %v214 = vmul.f32 %v79, %v198
    %v215 = vmul.f32 %v80, %v199
    %v216 = vmul.f32 %v81, %v200
    %v217 = vmul.f32 %v82, %v201
    %v218 = vmul.f32 %v83, %v202
    %v219 = vmul.f32 %v84, %v203
    %v220 = vmul.f32 %v85, %v204
    %v221 = vmul.f32 %v86, %v205
    %v222 = vadd.f32 %v55, %v206
    %v223 = vadd.f32 %v56, %v207
    %v224 = vadd.f32 %v57, %v208
    %v225 = vadd.f32 %v58, %v209
    %v226 = vadd.f32 %v59, %v210
    %v227 = vadd.f32 %v60, %v211
    %v228 = vadd.f32 %v61, %v212
    %v229 = vadd.f32 %v62, %v213
    %v230 = vadd.f32 %v63, %v214
    %v231 = vadd.f32 %v64, %v215
    %v232 = vadd.f32 %v65, %v216
    %v233 = vadd.f32 %v66, %v217
    %v234 = vadd.f32 %v67, %v218
    %v235 = vadd.f32 %v68, %v219
    %v236 = vadd.f32 %v69, %v220
    %v237 = vadd.f32 %v70, %v221
    %v238 = vld [vmem:[#allocation2] sm:$0xff]
    %v239 = vld [vmem:[#allocation3] sm:$0xff]
    %240 = vmatprep.subr.mxu0 0.0
    %241 = vmatpush1.xpose.msra.mxu0 %v222
    %242 = vmatprep.subr.mxu0 0.0
    %243 = vmatpush1.xpose.msra.mxu0 %v223
    %244 = vmatprep.subr.mxu0 0.0
    %245 = vmatpush1.xpose.msra.mxu0 %v224
    %246 = vmatprep.subr.mxu0 0.0
    %247 = vmatpush1.xpose.msra.mxu0 %v225
    %248 = vmatprep.subr.mxu0 0.0
    %249 = vmatpush1.xpose.msra.mxu0 %v226
    %250 = vmatprep.subr.mxu0 0.0
    %251 = vmatpush1.xpose.msra.mxu0 %v227
    %252 = vmatprep.subr.mxu0 0.0
    %253 = vmatpush1.xpose.msra.mxu0 %v228
    %254 = vmatprep.subr.mxu0 0.0
    %255 = vmatpush1.xpose.msra.mxu0 %v229
    %256 = vmatprep.subr.mxu0 0.0
    %257 = vmatpush1.xpose.msra.mxu0 %v230
    %258 = vmatprep.subr.mxu0 0.0
    %259 = vmatpush1.xpose.msra.mxu0 %v231
    %260 = vmatprep.subr.mxu0 0.0
    %261 = vmatpush1.xpose.msra.mxu0 %v232
    %262 = vmatprep.subr.mxu0 0.0
    %263 = vmatpush1.xpose.msra.mxu0 %v233
    %264 = vmatprep.subr.mxu0 0.0
    %265 = vmatpush1.xpose.msra.mxu0 %v234
    %266 = vmatprep.subr.mxu0 0.0
    %267 = vmatpush1.xpose.msra.mxu0 %v235
    %268 = vmatprep.subr.mxu0 0.0
    %269 = vmatpush1.xpose.msra.mxu0 %v236
    %270 = vmatprep.subr.mxu0 0.0
    %271 = vmatpush1.xpose.msra.mxu0 %v237
    %272 = vmatprep.subr.mxu0 0.0
    %273 = vmatpush1.xpose.msra.mxu0 0.0
    %274 = vmatprep.subr.mxu0 0.0
    %275 = vmatpush1.xpose.msra.mxu0 0.0
    %276 = vmatprep.subr.mxu0 0.0
    %277 = vmatpush1.xpose.msra.mxu0 0.0
    %278 = vmatprep.subr.mxu0 0.0
    %279 = vmatpush1.xpose.msra.mxu0 0.0
    %280 = vmatprep.subr.mxu0 0.0
    %281 = vmatpush1.xpose.msra.mxu0 0.0
    %282 = vmatprep.subr.mxu0 0.0
    %283 = vmatpush1.xpose.msra.mxu0 0.0
    %284 = vmatprep.subr.mxu0 0.0
    %285 = vmatpush1.xpose.msra.mxu0 0.0
    %286 = vmatprep.subr.mxu0 0.0
    %287 = vmatpush1.xpose.msra.mxu0 0.0
    %288 = vmatprep.subr.mxu0 0.0
    %289 = vmatpush1.xpose.msra.mxu0 0.0
    %290 = vmatprep.subr.mxu0 0.0
    %291 = vmatpush1.xpose.msra.mxu0 0.0
    %292 = vmatprep.subr.mxu0 0.0
    %293 = vmatpush1.xpose.msra.mxu0 0.0
    %294 = vmatprep.subr.mxu0 0.0
    %295 = vmatpush1.xpose.msra.mxu0 0.0
    %296 = vmatprep.subr.mxu0 0.0
    %297 = vmatpush1.xpose.msra.mxu0 0.0
    %298 = vmatprep.subr.mxu0 0.0
    %299 = vmatpush1.xpose.msra.mxu0 0.0
    %300 = vmatprep.subr.mxu0 0.0
    %301 = vmatpush1.xpose.msra.mxu0 0.0
    %302 = vmatprep.subr.mxu0 0.0
    %303 = vmatpush1.xpose.msra.mxu0 0.0
    %304 = vmatprep.mubr.f32.mxu0 0.0
    %305 = vmatmul.mubr.f32.gmra.mrb[0].mxu0 %v239
    %v306 = vpop.f32.mrb[0].mxu0
    %v307 = vadd.f32 0.0, %v306
    %v308 = vpop.f32.mrb[0].mxu0
    %309 = vdwg.mxu0
    %v310 = vadd.f32 %v238, %v307
    %311 = vst [vmem:[#allocation2] sm:$0xff] %v310
    // Predicated region
    $region38: #{tpu_custom_call.1} parent=1 // pred_check
      %p312 = pneg %p50
    $region39: #{tpu_custom_call.1} parent=1 // pred_check_branch
      %314 = sbr.rel (%p312) target = $region41
    $region40: #{tpu_custom_call.1} parent=1 // pred_region
      %v315 = vld [vmem:[#allocation2] sm:$0xff]
      %v316 = vld [vmem:[%s5] sm:$0x1]
      %v318 = vlaneseq
      %v319 = vshrl.u32 %v318, 7
      %v320 = vsub.s32 0, %v319
      %v321 = vrot.slane %v316, %v320
      %v323 = vadd.f32 %v315, %v321
      %324 = vst [vmem:[#allocation8] sm:$0xff] %v323
    $region41: #{tpu_custom_call.1} parent=1 // pred_fallthru
      _
    // Predicated region
    $region42: #{tpu_custom_call.1} parent=1 // pred_check
      _
    $region43: #{tpu_custom_call.1} parent=1 // pred_check_branch
      %326 = sbr.rel (0) target = $region45
    $region44: #{tpu_custom_call.1} parent=1 // pred_region
      %s328 = ssub.s32 128, 128
      %329 = vsyncadd [#allocation5], %s328
      %s331 = sshll.u32 [#allocation8], 4
      %s332 = int_to_ptr.vmem [resolvable:$true] %s331
      %334 = dma.vmem_to_hbm [thread:$0]  %s332, 128, %s6, [#allocation5]
    $region45: #{tpu_custom_call.1} parent=1 // pred_fallthru
      _
    // Predicated region
    $region46: #{tpu_custom_call.1} parent=1 // pred_check
      _
    $region47: #{tpu_custom_call.1} parent=1 // pred_check_branch
      %336 = sbr.rel (0) target = $region49
    $region48: #{tpu_custom_call.1} parent=1 // pred_region
      %337 = dma.done [#allocation5], 128
    $region49: #{tpu_custom_call.1} parent=1 // pred_fallthru
      _
    %338 = vsyncpa [#allocation4], 1
    %339 = vsyncpa [#allocation7], 1
    %340 = vsyncpa [#allocation5], 1

</llo_original>
